<compile_context>
chip_gen: v5e
topology: v5e:2x2
jax: 0.10.0
libtpu: 0.0.40
codegen_flags: <defaults>
</compile_context>

<pallas_src>
import functools

import jax
import jax.numpy as jnp
from jax import lax
from jax.experimental import pallas as pl
from jax.experimental.pallas import tpu as pltpu


_VMEM_LIMIT_BYTES = 32 * 1024 * 1024  # explicit; tile plan uses ~4 MiB at tm=tk=512


def _round_up(x, m):
    return ((x + m - 1) // m) * m


def _pick_tile(n_pad):
    for t in (512, 256, 128):
        if n_pad % t == 0:
            return t
    return n_pad


def _graph_conv_kernel(*refs, deg_col, fuse_score):
    """One GraphConv(norm='both', bias, ReLU) dst-tile; optional score fusion.

    Grid = (dst tiles M, src tiles K); K is the reduction axis (last).
    """
    if fuse_score:
        a_ref, f_ref, w_ref, b_ref, wp_ref, o_ref, acc_ref = refs
    else:
        a_ref, f_ref, w_ref, b_ref, o_ref, acc_ref = refs

    k = pl.program_id(1)

    @pl.when(k == 0)
    def _():
        acc_ref[...] = jnp.zeros_like(acc_ref)

    # Pure 0/1 adjacency tile on the MXU.  The feature tile already carries the
    # norm_src scaling plus a ones-column at lane `deg_col`, so the dst
    # in-degree falls out of the same reduction (no extra adjacency pass).
    acc_ref[...] += jnp.dot(a_ref[...], f_ref[...],
                            preferred_element_type=jnp.float32)

    @pl.when(k == pl.num_programs(1) - 1)
    def _():
        acc = acc_ref[...]
        in_deg = acc[:, deg_col:deg_col + 1]                    # fused row-sum of A
        norm_dst = lax.rsqrt(jnp.maximum(in_deg, 1.0))
        h = jnp.dot(acc * norm_dst, w_ref[...],
                    preferred_element_type=jnp.float32) + b_ref[...]
        h = jnp.maximum(h, 0.0)                                 # ReLU
        if fuse_score:
            # Per-node partial edge scores, lane-padded to 128 -> unmasked stores.
            o_ref[...] = jnp.dot(h, wp_ref[...],
                                 preferred_element_type=jnp.float32)
        else:
            o_ref[...] = h


def _tiled_graph_conv(adj, feat_s, w, b, *, deg_col, wp=None, tm, tk):
    n_dst, n_src = adj.shape
    f_in = feat_s.shape[1]
    fuse_score = wp is not None
    out_cols = wp.shape[1] if fuse_score else w.shape[1]

    grid = (n_dst // tm, n_src // tk)

    in_specs = [
        pl.BlockSpec((tm, tk), lambda m, k: (m, k)),            # adjacency tiles
        pl.BlockSpec((tk, f_in), lambda m, k: (k, 0)),          # scaled features
        pl.BlockSpec(w.shape, lambda m, k: (0, 0)),             # resident W
        pl.BlockSpec(b.shape, lambda m, k: (0, 0)),             # resident b
    ]
    operands = [adj, feat_s, w, b]
    if fuse_score:
        in_specs.append(pl.BlockSpec(wp.shape, lambda m, k: (0, 0)))
        operands.append(wp)

    kernel = functools.partial(_graph_conv_kernel, deg_col=deg_col,
                               fuse_score=fuse_score)

    return pl.pallas_call(
        kernel,
        out_shape=jax.ShapeDtypeStruct((n_dst, out_cols), jnp.float32),
        grid=grid,
        in_specs=in_specs,
        out_specs=pl.BlockSpec((tm, out_cols), lambda m, k: (m, 0)),
        scratch_shapes=[pltpu.VMEM((tm, f_in), jnp.float32)],
        compiler_params=pltpu.CompilerParams(
            dimension_semantics=("parallel", "arbitrary"),
            vmem_limit_bytes=_VMEM_LIMIT_BYTES,
        ),
    )(*operands)


def gnn_rank_forward(a0, a1, x, w1, b1, w2, b2, src_ids, dst_ids,
                     wp_src, wp_dst, bp):
    n = x.shape[0]
    in_f = x.shape[1]
    hid_f = w1.shape[1]
    out_f = w2.shape[1]

    n_pad = _round_up(max(n, 1), 128)
    in_f_pad = _round_up(in_f + 1, 128)      # +1 lane reserved for the degree col
    hid_f_pad = _round_up(hid_f + 1, 128)
    out_f_pad = _round_up(out_f, 128)
    p_cols = 128                             # partial-score table width (lanes)

    tm = tk = _pick_tile(n_pad)

    # ---- padded, lane-dense operands (zero padding is mathematically inert) --
    a0p = jnp.zeros((n_pad, n_pad), jnp.float32).at[:n, :n].set(a0)
    a1p = jnp.zeros((n_pad, n_pad), jnp.float32).at[:n, :n].set(a1)

    x_p = jnp.zeros((n_pad, in_f_pad), jnp.float32).at[:n, :in_f].set(x)

    w1p = jnp.zeros((in_f_pad, hid_f_pad), jnp.float32).at[:in_f, :hid_f].set(w1)
    b1p = jnp.zeros((1, hid_f_pad), jnp.float32).at[:, :hid_f].set(b1)
    w2p = jnp.zeros((hid_f_pad, out_f_pad), jnp.float32).at[:hid_f, :out_f].set(w2)
    b2p = jnp.zeros((1, out_f_pad), jnp.float32).at[:, :out_f].set(b2)

    # ScorePredictor Linear(2F, 1) split into per-node src/dst halves, padded to
    # 128 output lanes so the fused epilogue store stays unmasked.
    wpp = (jnp.zeros((out_f_pad, p_cols), jnp.float32)
           .at[:out_f, 0].set(wp_src[:, 0])
           .at[:out_f, 1].set(wp_dst[:, 0]))

    # Src out-degree norms (one column-sum per adjacency). The dst in-degree is
    # fused into the kernel's reduction via the ones-column.
    # TODO(synk): at scale, derive these from the block's edge lists (DGL
    # graph.out_degrees()) and batch many sampled blocks per pallas_call with a
    # leading grid axis + scalar-prefetched per-block offsets.
    ns0 = lax.rsqrt(jnp.maximum(jnp.sum(a0p, axis=0), 1.0)).reshape(-1, 1)
    ns1 = lax.rsqrt(jnp.maximum(jnp.sum(a1p, axis=0), 1.0)).reshape(-1, 1)

    # ---- layer 1 ------------------------------------------------------------
    f1 = (x_p * ns0).at[:, in_f].set(1.0)            # ones-column -> fused in-degree
    h1 = _tiled_graph_conv(a0p, f1, w1p, b1p, deg_col=in_f, tm=tm, tk=tk)

    # ---- layer 2 + fused partial scores --------------------------------------
    f2 = (h1 * ns1).at[:, hid_f].set(1.0)
    p = _tiled_graph_conv(a1p, f2, w2p, b2p, deg_col=hid_f, wp=wpp, tm=tm, tk=tk)

    # ---- ScorePredictor edge gather ------------------------------------------
    # score_e = sigmoid(p_src[src_e] + p_dst[dst_e] + bp)
    # TODO(synk): per-edge gather done with XLA take outside Pallas; at scale a
    # DMA-gather kernel with scalar-prefetched edge ids would fuse this too.
    p_src = p[:n, 0]
    p_dst = p[:n, 1]
    logits = jnp.take(p_src, src_ids) + jnp.take(p_dst, dst_ids) + bp[0, 0]
    return jax.nn.sigmoid(logits)                    # torch.squeeze -> (E,)


def _reference(a0, a1, x, w1, b1, w2, b2, src_ids, dst_ids, wp_src, wp_dst, bp):
    """Pure-JAX reference for correctness check."""
    def gc(adj, feat, w, b):
        ns = lax.rsqrt(jnp.maximum(jnp.sum(adj, axis=0, keepdims=True), 1.0))
        nd = lax.rsqrt(jnp.maximum(jnp.sum(adj, axis=1, keepdims=True), 1.0))
        return jnp.maximum((adj * ns * nd) @ feat @ w + b, 0.0)
    h2 = gc(a1, gc(a0, x, w1, b1), w2, b2)
    logit = h2[src_ids] @ wp_src + h2[dst_ids] @ wp_dst + bp
    return jnp.squeeze(jax.nn.sigmoid(logit), axis=-1)


if __name__ == "__main__":
    # Small shapes consistent with the module: single node type, single
    # relation 'nb', two message-passing blocks over the same 16 nodes.
    N = 16            # nodes
    IN_F = 8          # in_features
    HID_F = 16        # hidden_features
    OUT_F = 16        # out_features
    E = 24            # edges in edge_subgraph (etype 'nb')

    key = jax.random.PRNGKey(0)
    keys = jax.random.split(key, 10)

    # Graph structure (deterministic).
    a0 = jax.random.bernoulli(keys[0], 0.3, (N, N)).astype(jnp.float32)
    a1 = jax.random.bernoulli(keys[1], 0.3, (N, N)).astype(jnp.float32)
    edge_idx = jnp.arange(E)
    src_ids = (edge_idx % N).astype(jnp.int32)
    dst_ids = ((edge_idx * 5 + 3) % N).astype(jnp.int32)

    # Node features.
    x = jax.random.normal(keys[2], (N, IN_F), dtype=jnp.float32)

    # Parameters (deterministic init; shapes follow the torch module).
    w1 = 0.2 * jax.random.normal(keys[3], (IN_F, HID_F), dtype=jnp.float32)
    b1 = 0.1 * jax.random.normal(keys[4], (1, HID_F), dtype=jnp.float32)
    w2 = 0.2 * jax.random.normal(keys[5], (HID_F, OUT_F), dtype=jnp.float32)
    b2 = 0.1 * jax.random.normal(keys[6], (1, OUT_F), dtype=jnp.float32)
    # ScorePredictor: Linear(out_features * 2, 1) split into src/dst halves.
    wp_src = 0.2 * jax.random.normal(keys[7], (OUT_F, 1), dtype=jnp.float32)
    wp_dst = 0.2 * jax.random.normal(keys[8], (OUT_F, 1), dtype=jnp.float32)
    bp = 0.1 * jax.random.normal(keys[9], (1, 1), dtype=jnp.float32)

    args = (a0, a1, x, w1, b1, w2, b2, src_ids, dst_ids, wp_src, wp_dst, bp)

    score = jax.block_until_ready(gnn_rank_forward(*args))
    ref = jax.block_until_ready(_reference(*args))

    assert score.shape == (E,), score.shape
    assert jnp.allclose(score, ref, atol=1e-5, rtol=1e-5), (score, ref)
    print("KERNEL_OK")
</pallas_src>

<mosaic_0001>
module attributes {stable_mosaic.version = 11 : i64} {
  func.func @_graph_conv_kernel(%arg0: i32, %arg1: i32, %arg2: memref<128x128xf32, #tpu.memory_space<vmem>>, %arg3: memref<128x128xf32, #tpu.memory_space<vmem>>, %arg4: memref<128x128xf32, #tpu.memory_space<vmem>>, %arg5: memref<1x128xf32, #tpu.memory_space<vmem>>, %arg6: memref<128x128xf32, #tpu.memory_space<vmem>>, %arg7: memref<128x128xf32, #tpu.memory_space<vmem>>) attributes {dimension_semantics = [#tpu.dimension_semantics<parallel>, #tpu.dimension_semantics<arbitrary>], iteration_bounds = array<i64: 1, 1>, scalar_prefetch = 0 : i64, scratch_operands = 1 : i64, tpu.core_type = #tpu.core_type<tc>, window_params = [{transform_indices = @transform_0, window_bounds = array<i64: 128, 128>}, {transform_indices = @transform_1, window_bounds = array<i64: 128, 128>}, {pipeline_mode = #tpu.pipeline_mode<synchronous>, transform_indices = @transform_2, window_bounds = array<i64: 128, 128>}, {pipeline_mode = #tpu.pipeline_mode<synchronous>, transform_indices = @transform_3, window_bounds = array<i64: 1, 128>}, {transform_indices = @transform_4, window_bounds = array<i64: 128, 128>}]} {
    %c0_i32 = arith.constant 0 : i32
    %0 = arith.cmpi eq, %arg1, %c0_i32 : i32
    %1 = arith.extui %0 : i1 to i32
    %c0_i32_0 = arith.constant 0 : i32
    %2 = arith.cmpi ne, %1, %c0_i32_0 : i32
    scf.if %2 {
      %cst_10 = arith.constant 0.000000e+00 : f32
      %12 = vector.broadcast %cst_10 : f32 to vector<128x128xf32>
      %c0_11 = arith.constant 0 : index
      %c0_12 = arith.constant 0 : index
      %13 = vector.load %arg7[%c0_11, %c0_12] : memref<128x128xf32, #tpu.memory_space<vmem>>, vector<128x128xf32>
      tpu.vector_store %arg7[%c0_11, %c0_12], %12 {strides = array<i32>} : memref<128x128xf32, #tpu.memory_space<vmem>>, vector<128x128xf32>,
    } else {
    }
    %c0 = arith.constant 0 : index
    %c0_1 = arith.constant 0 : index
    %3 = vector.load %arg7[%c0, %c0_1] : memref<128x128xf32, #tpu.memory_space<vmem>>, vector<128x128xf32>
    %c0_2 = arith.constant 0 : index
    %c0_3 = arith.constant 0 : index
    %4 = vector.load %arg2[%c0_2, %c0_3] : memref<128x128xf32, #tpu.memory_space<vmem>>, vector<128x128xf32>
    %c0_4 = arith.constant 0 : index
    %c0_5 = arith.constant 0 : index
    %5 = vector.load %arg3[%c0_4, %c0_5] : memref<128x128xf32, #tpu.memory_space<vmem>>, vector<128x128xf32>
    %cst = arith.constant dense<0.000000e+00> : vector<128x128xf32>
    %6 = tpu.matmul %4, %5, %cst {dimension_numbers = #tpu.dot_dimension_numbers<[1], [0], [0], [1], [0, 0, 1, 1], [], []>} : vector<128x128xf32>, vector<128x128xf32>, vector<128x128xf32> -> vector<128x128xf32>
    %7 = arith.addf %3, %6 : vector<128x128xf32>
    %c0_6 = arith.constant 0 : index
    %c0_7 = arith.constant 0 : index
    %8 = vector.load %arg7[%c0_6, %c0_7] : memref<128x128xf32, #tpu.memory_space<vmem>>, vector<128x128xf32>
    tpu.vector_store %arg7[%c0_6, %c0_7], %7 {strides = array<i32>} : memref<128x128xf32, #tpu.memory_space<vmem>>, vector<128x128xf32>,
    %c0_i32_8 = arith.constant 0 : i32
    %9 = arith.cmpi eq, %arg1, %c0_i32_8 : i32
    %10 = arith.extui %9 : i1 to i32
    %c0_i32_9 = arith.constant 0 : i32
    %11 = arith.cmpi ne, %10, %c0_i32_9 : i32
    scf.if %11 {
      %c0_10 = arith.constant 0 : index
      %c0_11 = arith.constant 0 : index
      %12 = vector.load %arg7[%c0_10, %c0_11] : memref<128x128xf32, #tpu.memory_space<vmem>>, vector<128x128xf32>
      %13 = vector.extract_strided_slice %12 {offsets = [0, 8], sizes = [128, 1], strides = [1, 1]} : vector<128x128xf32> to vector<128x1xf32>
      %cst_12 = arith.constant 1.000000e+00 : f32
      %14 = vector.broadcast %cst_12 : f32 to vector<128x1xf32>
      %15 = arith.maximumf %13, %14 : vector<128x1xf32>
      %16 = math.rsqrt %15 : vector<128x1xf32>
      %17 = vector.broadcast %16 : vector<128x1xf32> to vector<128x128xf32>
      %18 = arith.mulf %12, %17 : vector<128x128xf32>
      %c0_13 = arith.constant 0 : index
      %c0_14 = arith.constant 0 : index
      %19 = vector.load %arg4[%c0_13, %c0_14] : memref<128x128xf32, #tpu.memory_space<vmem>>, vector<128x128xf32>
      %cst_15 = arith.constant dense<0.000000e+00> : vector<128x128xf32>
      %20 = tpu.matmul %18, %19, %cst_15 {dimension_numbers = #tpu.dot_dimension_numbers<[1], [0], [0], [1], [0, 0, 1, 1], [], []>} : vector<128x128xf32>, vector<128x128xf32>, vector<128x128xf32> -> vector<128x128xf32>
      %c0_16 = arith.constant 0 : index
      %c0_17 = arith.constant 0 : index
      %21 = vector.load %arg5[%c0_16, %c0_17] : memref<1x128xf32, #tpu.memory_space<vmem>>, vector<1x128xf32>
      %22 = vector.broadcast %21 : vector<1x128xf32> to vector<128x128xf32>
      %23 = arith.addf %20, %22 : vector<128x128xf32>
      %cst_18 = arith.constant 0.000000e+00 : f32
      %24 = vector.broadcast %cst_18 : f32 to vector<128x128xf32>
      %25 = arith.maximumf %23, %24 : vector<128x128xf32>
      %c0_19 = arith.constant 0 : index
      %c0_20 = arith.constant 0 : index
      %26 = vector.load %arg6[%c0_19, %c0_20] : memref<128x128xf32, #tpu.memory_space<vmem>>, vector<128x128xf32>
      tpu.vector_store %arg6[%c0_19, %c0_20], %25 {strides = array<i32>} : memref<128x128xf32, #tpu.memory_space<vmem>>, vector<128x128xf32>,
    } else {
    }
    return
  }
  func.func @transform_0(%arg0: i32, %arg1: i32) -> (i32, i32) {
    %c0_i32 = arith.constant 0 : i32
    return %arg0, %arg1 : i32, i32
  }
  func.func @transform_1(%arg0: i32, %arg1: i32) -> (i32, i32) {
    %c0_i32 = arith.constant 0 : i32
    %c0_i32_0 = arith.constant 0 : i32
    return %arg1, %c0_i32 : i32, i32
  }
  func.func @transform_2(%arg0: i32, %arg1: i32) -> (i32, i32) {
    %c0_i32 = arith.constant 0 : i32
    %c0_i32_0 = arith.constant 0 : i32
    %c0_i32_1 = arith.constant 0 : i32
    return %c0_i32, %c0_i32_0 : i32, i32
  }
  func.func @transform_3(%arg0: i32, %arg1: i32) -> (i32, i32) {
    %c0_i32 = arith.constant 0 : i32
    %c0_i32_0 = arith.constant 0 : i32
    %c0_i32_1 = arith.constant 0 : i32
    return %c0_i32, %c0_i32_0 : i32, i32
  }
  func.func @transform_4(%arg0: i32, %arg1: i32) -> (i32, i32) {
    %c0_i32 = arith.constant 0 : i32
    %c0_i32_0 = arith.constant 0 : i32
    return %arg0, %c0_i32 : i32, i32
  }
}

</mosaic_0001>

<llo_original>
// kernel: tpu_custom_call.1
$region0: #{tpu_custom_call.1}
  #allocation0 [shape = 'u32[]', space=smem, size = 0x4, offset = 0x4, fixed_abs, tag = 'smem constant byte address 0x4 - core index']
  #allocation1 [shape = 'u32[72,128]{1,0:T(1,128)}', space=vmem, size = 0x9000, scoped, tag = 'internal scratch']
  #allocation2 [shape = 'f32[128,128]{1,0:T(8,128)}', space=vmem, size = 0x10000, scoped, tag = 'scratch operand']
  %s0 = inlined_call_operand.hbm [shape: f32[128,128], index: 0, kind: input, shape index: {}]
  %s1 = inlined_call_operand.hbm [shape: f32[128,128], index: 1, kind: input, shape index: {}]
  %s2 = inlined_call_operand.hbm [shape: f32[128,128], index: 2, kind: input, shape index: {}]
  %s3 = inlined_call_operand.vmem [shape: f32[1,128], index: 3, kind: input, shape index: {}]
  %s4 = inlined_call_operand.hbm [shape: f32[128,128], index: 4, kind: output, shape index: {}]
  %s5 = sld [smem:[#allocation0]]
  $region46: #{tpu_custom_call.1} parent=0
    _
  %s7 = ssub.s32 1, %s5
  %s8 = scalar_select 0, %s7, %s5
  $region1: #{tpu_custom_call.1} parent=0
    #allocation3 [shape = 'u8[65536]{0}', space=vmem, size = 0x10000, scoped, tag = 'input window, operand 0, single buffered']
    #allocation4 [shape = 's32[1]{0}', space=sflag, size = 0x4, scoped, tag = 'scoped memory for tpu_custom_call.1']
    #allocation5 [shape = 's32[1]{0}', space=sflag, size = 0x4, scoped, tag = 'scoped memory for tpu_custom_call.1']
    #allocation6 [shape = 'u8[65536]{0}', space=vmem, size = 0x10000, scoped, tag = 'input window, operand 1, single buffered']
    #allocation7 [shape = 's32[1]{0}', space=sflag, size = 0x4, scoped, tag = 'scoped memory for tpu_custom_call.1']
    #allocation8 [shape = 'u8[65536]{0}', space=vmem, size = 0x10000, scoped, tag = 'input window, operand 2, single buffered']
    #allocation9 [shape = 'u8[65536]{0}', space=vmem, size = 0x10000, scoped, tag = 'output window, operand 0, single buffered']
    %9 = vsyncpa [#allocation4], 0
    %10 = vsyncpa [#allocation7], 0
    %11 = vsyncpa [#allocation5], 0
    // Predicated region
    $region2: #{tpu_custom_call.1} parent=1 // pred_check
      _
    $region3: #{tpu_custom_call.1} parent=1 // pred_check_branch
      %13 = sbr.rel (0) target = $region5
    $region4: #{tpu_custom_call.1} parent=1 // pred_region
      %15 = vsyncadd [#allocation4], 0
      %s16 = sshll.u32 %s0, 4
      %s17 = int_to_ptr.hbm [resolvable:$true] %s16
      %s18 = sshll.u32 [#allocation3], 4
      %s19 = int_to_ptr.vmem [resolvable:$true] %s18
      %24 = dma.hbm_to_vmem [thread:$0]  %s17, 2048, %s19, [#allocation4], 128, 128, 8
    $region5: #{tpu_custom_call.1} parent=1 // pred_fallthru
      _
    // Predicated region
    $region6: #{tpu_custom_call.1} parent=1 // pred_check
      _
    $region7: #{tpu_custom_call.1} parent=1 // pred_check_branch
      %26 = sbr.rel (0) target = $region9
    $region8: #{tpu_custom_call.1} parent=1 // pred_region
      %28 = vsyncadd [#allocation7], 0
      %s29 = sshll.u32 %s1, 4
      %s30 = int_to_ptr.hbm [resolvable:$true] %s29
      %s31 = sshll.u32 [#allocation6], 4
      %s32 = int_to_ptr.vmem [resolvable:$true] %s31
      %37 = dma.hbm_to_vmem [thread:$0]  %s30, 2048, %s32, [#allocation7], 128, 128, 8
    $region9: #{tpu_custom_call.1} parent=1 // pred_fallthru
      _
    // Predicated region
    $region10: #{tpu_custom_call.1} parent=1 // pred_check
      _
    $region11: #{tpu_custom_call.1} parent=1 // pred_check_branch
      %39 = sbr.rel (0) target = $region13
    $region12: #{tpu_custom_call.1} parent=1 // pred_region
      %41 = vsyncadd [#allocation7], 0
      %s42 = sshll.u32 %s2, 4
      %s43 = int_to_ptr.hbm [resolvable:$true] %s42
      %s44 = sshll.u32 [#allocation8], 4
      %s45 = int_to_ptr.vmem [resolvable:$true] %s44
      %50 = dma.hbm_to_vmem [thread:$0]  %s43, 2048, %s45, [#allocation7], 128, 128, 8
    $region13: #{tpu_custom_call.1} parent=1 // pred_fallthru
      _
    // Predicated region
    $region14: #{tpu_custom_call.1} parent=1 // pred_check
      _
    $region15: #{tpu_custom_call.1} parent=1 // pred_check_branch
      %52 = sbr.rel (0) target = $region17
    $region16: #{tpu_custom_call.1} parent=1 // pred_region
      _
    $region17: #{tpu_custom_call.1} parent=1 // pred_fallthru
      _
    // Predicated region
    $region18: #{tpu_custom_call.1} parent=1 // pred_check
      _
    $region19: #{tpu_custom_call.1} parent=1 // pred_check_branch
      %54 = sbr.rel (0) target = $region21
    $region20: #{tpu_custom_call.1} parent=1 // pred_region
      %56 = dma.done [#allocation4], 2048
    $region21: #{tpu_custom_call.1} parent=1 // pred_fallthru
      _
    // Predicated region
    $region22: #{tpu_custom_call.1} parent=1 // pred_check
      _
    $region23: #{tpu_custom_call.1} parent=1 // pred_check_branch
      %58 = sbr.rel (0) target = $region25
    $region24: #{tpu_custom_call.1} parent=1 // pred_region
      %60 = dma.done [#allocation7], 2048
    $region25: #{tpu_custom_call.1} parent=1 // pred_fallthru
      _
    // Predicated region
    $region26: #{tpu_custom_call.1} parent=1 // pred_check
      _
    $region27: #{tpu_custom_call.1} parent=1 // pred_check_branch
      %62 = sbr.rel (0) target = $region29
    $region28: #{tpu_custom_call.1} parent=1 // pred_region
      %64 = dma.done [#allocation7], 2048
    $region29: #{tpu_custom_call.1} parent=1 // pred_fallthru
      _
    %p65 = scmp.eq.s32.totalorder 0, 0
    // Predicated region
    $region30: #{tpu_custom_call.1} parent=1 // pred_check
      %p66 = pneg %p65
    $region31: #{tpu_custom_call.1} parent=1 // pred_check_branch
      %68 = sbr.rel (%p66) target = $region33
    $region32: #{tpu_custom_call.1} parent=1 // pred_region
      %69 = vst [vmem:[#allocation2] sm:$0xff] 0.0
      %70 = vst [vmem:[#allocation2 + $0x8] sm:$0xff] 0.0
      %71 = vst [vmem:[#allocation2 + $0x10] sm:$0xff] 0.0
      %72 = vst [vmem:[#allocation2 + $0x18] sm:$0xff] 0.0
      %73 = vst [vmem:[#allocation2 + $0x20] sm:$0xff] 0.0
      %74 = vst [vmem:[#allocation2 + $0x28] sm:$0xff] 0.0
      %75 = vst [vmem:[#allocation2 + $0x30] sm:$0xff] 0.0
      %76 = vst [vmem:[#allocation2 + $0x38] sm:$0xff] 0.0
      %77 = vst [vmem:[#allocation2 + $0x40] sm:$0xff] 0.0
      %78 = vst [vmem:[#allocation2 + $0x48] sm:$0xff] 0.0
      %79 = vst [vmem:[#allocation2 + $0x50] sm:$0xff] 0.0
      %80 = vst [vmem:[#allocation2 + $0x58] sm:$0xff] 0.0
      %81 = vst [vmem:[#allocation2 + $0x60] sm:$0xff] 0.0
      %82 = vst [vmem:[#allocation2 + $0x68] sm:$0xff] 0.0
      %83 = vst [vmem:[#allocation2 + $0x70] sm:$0xff] 0.0
      %84 = vst [vmem:[#allocation2 + $0x78] sm:$0xff] 0.0
    $region33: #{tpu_custom_call.1} parent=1 // pred_fallthru
      _
    %v85 = vld [vmem:[#allocation2] sm:$0xff]
    %v86 = vld [vmem:[#allocation2 + $0x8] sm:$0xff]
    %v87 = vld [vmem:[#allocation2 + $0x10] sm:$0xff]
    %v88 = vld [vmem:[#allocation2 + $0x18] sm:$0xff]
    %v89 = vld [vmem:[#allocation2 + $0x20] sm:$0xff]
    %v90 = vld [vmem:[#allocation2 + $0x28] sm:$0xff]
    %v91 = vld [vmem:[#allocation2 + $0x30] sm:$0xff]
    %v92 = vld [vmem:[#allocation2 + $0x38] sm:$0xff]
    %v93 = vld [vmem:[#allocation2 + $0x40] sm:$0xff]
    %v94 = vld [vmem:[#allocation2 + $0x48] sm:$0xff]
    %v95 = vld [vmem:[#allocation2 + $0x50] sm:$0xff]
    %v96 = vld [vmem:[#allocation2 + $0x58] sm:$0xff]
    %v97 = vld [vmem:[#allocation2 + $0x60] sm:$0xff]
    %v98 = vld [vmem:[#allocation2 + $0x68] sm:$0xff]
    %v99 = vld [vmem:[#allocation2 + $0x70] sm:$0xff]
    %v100 = vld [vmem:[#allocation2 + $0x78] sm:$0xff]
    %v101 = vld [vmem:[#allocation3] sm:$0xff]
    %v102 = vld [vmem:[#allocation3 + $0x8] sm:$0xff]
    %v103 = vld [vmem:[#allocation3 + $0x10] sm:$0xff]
    %v104 = vld [vmem:[#allocation3 + $0x18] sm:$0xff]
    %v105 = vld [vmem:[#allocation3 + $0x20] sm:$0xff]
    %v106 = vld [vmem:[#allocation3 + $0x28] sm:$0xff]
    %v107 = vld [vmem:[#allocation3 + $0x30] sm:$0xff]
    %v108 = vld [vmem:[#allocation3 + $0x38] sm:$0xff]
    %v109 = vld [vmem:[#allocation3 + $0x40] sm:$0xff]
    %v110 = vld [vmem:[#allocation3 + $0x48] sm:$0xff]
    %v111 = vld [vmem:[#allocation3 + $0x50] sm:$0xff]
    %v112 = vld [vmem:[#allocation3 + $0x58] sm:$0xff]
    %v113 = vld [vmem:[#allocation3 + $0x60] sm:$0xff]
    %v114 = vld [vmem:[#allocation3 + $0x68] sm:$0xff]
    %v115 = vld [vmem:[#allocation3 + $0x70] sm:$0xff]
    %v116 = vld [vmem:[#allocation3 + $0x78] sm:$0xff]
    %v117 = vld [vmem:[#allocation6] sm:$0xff]
    %v118 = vld [vmem:[#allocation6 + $0x8] sm:$0xff]
    %v119 = vld [vmem:[#allocation6 + $0x10] sm:$0xff]
    %v120 = vld [vmem:[#allocation6 + $0x18] sm:$0xff]
    %v121 = vld [vmem:[#allocation6 + $0x20] sm:$0xff]
    %v122 = vld [vmem:[#allocation6 + $0x28] sm:$0xff]
    %v123 = vld [vmem:[#allocation6 + $0x30] sm:$0xff]
    %v124 = vld [vmem:[#allocation6 + $0x38] sm:$0xff]
    %v125 = vld [vmem:[#allocation6 + $0x40] sm:$0xff]
    %v126 = vld [vmem:[#allocation6 + $0x48] sm:$0xff]
    %v127 = vld [vmem:[#allocation6 + $0x50] sm:$0xff]
    %v128 = vld [vmem:[#allocation6 + $0x58] sm:$0xff]
    %v129 = vld [vmem:[#allocation6 + $0x60] sm:$0xff]
    %v130 = vld [vmem:[#allocation6 + $0x68] sm:$0xff]
    %v131 = vld [vmem:[#allocation6 + $0x70] sm:$0xff]
    %v132 = vld [vmem:[#allocation6 + $0x78] sm:$0xff]
    %133 = vmatpush.msra.mxu0 %v132
    %134 = vmatpush.msra.mxu0 %v131
    %135 = vmatpush.msra.mxu0 %v130
    %136 = vmatpush.msra.mxu0 %v129
    %137 = vmatpush.msra.mxu0 %v128
    %138 = vmatpush.msra.mxu0 %v127
    %139 = vmatpush.msra.mxu0 %v126
    %140 = vmatpush.msra.mxu0 %v125
    %141 = vmatpush.msra.mxu0 %v124
    %142 = vmatpush.msra.mxu0 %v123
    %143 = vmatpush.msra.mxu0 %v122
    %144 = vmatpush.msra.mxu0 %v121
    %145 = vmatpush.msra.mxu0 %v120
    %146 = vmatpush.msra.mxu0 %v119
    %147 = vmatpush.msra.mxu0 %v118
    %148 = vmatpush.msra.mxu0 %v117
    %149 = vmatmul.f32.gmra.mxu0 %v101
    %v150 = vpop.f32.mrf.mxu0
    %v151 = vadd.f32 0.0, %v150
    %152 = vmatmul.f32.gmra.mxu0 %v102
    %v153 = vpop.f32.mrf.mxu0
    %v154 = vadd.f32 0.0, %v153
    %155 = vmatmul.f32.gmra.mxu0 %v103
    %v156 = vpop.f32.mrf.mxu0
    %v157 = vadd.f32 0.0, %v156
    %158 = vmatmul.f32.gmra.mxu0 %v104
    %v159 = vpop.f32.mrf.mxu0
    %v160 = vadd.f32 0.0, %v159
    %161 = vmatmul.f32.gmra.mxu0 %v105
    %v162 = vpop.f32.mrf.mxu0
    %v163 = vadd.f32 0.0, %v162
    %164 = vmatmul.f32.gmra.mxu0 %v106
    %v165 = vpop.f32.mrf.mxu0
    %v166 = vadd.f32 0.0, %v165
    %167 = vmatmul.f32.gmra.mxu0 %v107
    %v168 = vpop.f32.mrf.mxu0
    %v169 = vadd.f32 0.0, %v168
    %170 = vmatmul.f32.gmra.mxu0 %v108
    %v171 = vpop.f32.mrf.mxu0
    %v172 = vadd.f32 0.0, %v171
    %173 = vmatmul.f32.gmra.mxu0 %v109
    %v174 = vpop.f32.mrf.mxu0
    %v175 = vadd.f32 0.0, %v174
    %176 = vmatmul.f32.gmra.mxu0 %v110
    %v177 = vpop.f32.mrf.mxu0
    %v178 = vadd.f32 0.0, %v177
    %179 = vmatmul.f32.gmra.mxu0 %v111
    %v180 = vpop.f32.mrf.mxu0
    %v181 = vadd.f32 0.0, %v180
    %182 = vmatmul.f32.gmra.mxu0 %v112
    %v183 = vpop.f32.mrf.mxu0
    %v184 = vadd.f32 0.0, %v183
    %185 = vmatmul.f32.gmra.mxu0 %v113
    %v186 = vpop.f32.mrf.mxu0
    %v187 = vadd.f32 0.0, %v186
    %188 = vmatmul.f32.gmra.mxu0 %v114
    %v189 = vpop.f32.mrf.mxu0
    %v190 = vadd.f32 0.0, %v189
    %191 = vmatmul.f32.gmra.mxu0 %v115
    %v192 = vpop.f32.mrf.mxu0
    %v193 = vadd.f32 0.0, %v192
    %194 = vmatmul.f32.gmra.mxu0 %v116
    %v195 = vpop.f32.mrf.mxu0
    %v196 = vadd.f32 0.0, %v195
    %197 = vdwg.mxu0
    %v198 = vadd.f32 %v85, %v151
    %v199 = vadd.f32 %v86, %v154
    %v200 = vadd.f32 %v87, %v157
    %v201 = vadd.f32 %v88, %v160
    %v202 = vadd.f32 %v89, %v163
    %v203 = vadd.f32 %v90, %v166
    %v204 = vadd.f32 %v91, %v169
    %v205 = vadd.f32 %v92, %v172
    %v206 = vadd.f32 %v93, %v175
    %v207 = vadd.f32 %v94, %v178
    %v208 = vadd.f32 %v95, %v181
    %v209 = vadd.f32 %v96, %v184
    %v210 = vadd.f32 %v97, %v187
    %v211 = vadd.f32 %v98, %v190
    %v212 = vadd.f32 %v99, %v193
    %v213 = vadd.f32 %v100, %v196
    %214 = vst [vmem:[#allocation2] sm:$0xff] %v198
    %215 = vst [vmem:[#allocation2 + $0x8] sm:$0xff] %v199
    %216 = vst [vmem:[#allocation2 + $0x10] sm:$0xff] %v200
    %217 = vst [vmem:[#allocation2 + $0x18] sm:$0xff] %v201
    %218 = vst [vmem:[#allocation2 + $0x20] sm:$0xff] %v202
    %219 = vst [vmem:[#allocation2 + $0x28] sm:$0xff] %v203
    %220 = vst [vmem:[#allocation2 + $0x30] sm:$0xff] %v204
    %221 = vst [vmem:[#allocation2 + $0x38] sm:$0xff] %v205
    %222 = vst [vmem:[#allocation2 + $0x40] sm:$0xff] %v206
    %223 = vst [vmem:[#allocation2 + $0x48] sm:$0xff] %v207
    %224 = vst [vmem:[#allocation2 + $0x50] sm:$0xff] %v208
    %225 = vst [vmem:[#allocation2 + $0x58] sm:$0xff] %v209
    %226 = vst [vmem:[#allocation2 + $0x60] sm:$0xff] %v210
    %227 = vst [vmem:[#allocation2 + $0x68] sm:$0xff] %v211
    %228 = vst [vmem:[#allocation2 + $0x70] sm:$0xff] %v212
    %229 = vst [vmem:[#allocation2 + $0x78] sm:$0xff] %v213
    // Predicated region
    $region34: #{tpu_custom_call.1} parent=1 // pred_check
      %p230 = pneg %p65
    $region35: #{tpu_custom_call.1} parent=1 // pred_check_branch
      %232 = sbr.rel (%p230) target = $region37
    $region36: #{tpu_custom_call.1} parent=1 // pred_region
      %v233 = vld [vmem:[#allocation2] sm:$0xff]
      %v234 = vld [vmem:[#allocation2 + $0x8] sm:$0xff]
      %v235 = vld [vmem:[#allocation2 + $0x10] sm:$0xff]
      %v236 = vld [vmem:[#allocation2 + $0x18] sm:$0xff]
      %v237 = vld [vmem:[#allocation2 + $0x20] sm:$0xff]
      %v238 = vld [vmem:[#allocation2 + $0x28] sm:$0xff]
      %v239 = vld [vmem:[#allocation2 + $0x30] sm:$0xff]
      %v240 = vld [vmem:[#allocation2 + $0x38] sm:$0xff]
      %v241 = vld [vmem:[#allocation2 + $0x40] sm:$0xff]
      %v242 = vld [vmem:[#allocation2 + $0x48] sm:$0xff]
      %v243 = vld [vmem:[#allocation2 + $0x50] sm:$0xff]
      %v244 = vld [vmem:[#allocation2 + $0x58] sm:$0xff]
      %v245 = vld [vmem:[#allocation2 + $0x60] sm:$0xff]
      %v246 = vld [vmem:[#allocation2 + $0x68] sm:$0xff]
      %v247 = vld [vmem:[#allocation2 + $0x70] sm:$0xff]
      %v248 = vld [vmem:[#allocation2 + $0x78] sm:$0xff]
      %v249 = vmax.f32 %v233, 1.0
      %v250 = vmax.f32 %v234, 1.0
      %v251 = vmax.f32 %v235, 1.0
      %v252 = vmax.f32 %v236, 1.0
      %v253 = vmax.f32 %v237, 1.0
      %v254 = vmax.f32 %v238, 1.0
      %v255 = vmax.f32 %v239, 1.0
      %v256 = vmax.f32 %v240, 1.0
      %v257 = vmax.f32 %v241, 1.0
      %v258 = vmax.f32 %v242, 1.0
      %v259 = vmax.f32 %v243, 1.0
      %v260 = vmax.f32 %v244, 1.0
      %v261 = vmax.f32 %v245, 1.0
      %v262 = vmax.f32 %v246, 1.0
      %v263 = vmax.f32 %v247, 1.0
      %v264 = vmax.f32 %v248, 1.0
      %v265 = vrsqrt.pop %v249
      %v266 = vmul.f32 %v265, %v249
      %v267 = vmul.f32 %v266, %v265
      %v268 = vmul.f32 0.5, %v267
      %v269 = vsub.f32 1.5, %v268
      %v270 = vmul.f32 %v265, %v269
      %vm271 = vweird.f32 %v249
      %vm272 = vweird.f32 %v265
      %vm273 = vmor %vm271, %vm272
      %v274 = vsel %vm273, %v265, %v270
      %v275 = vrsqrt.pop %v250
      %v276 = vmul.f32 %v275, %v250
      %v277 = vmul.f32 %v276, %v275
      %v278 = vmul.f32 0.5, %v277
      %v279 = vsub.f32 1.5, %v278
      %v280 = vmul.f32 %v275, %v279
      %vm281 = vweird.f32 %v250
      %vm282 = vweird.f32 %v275
      %vm283 = vmor %vm281, %vm282
      %v284 = vsel %vm283, %v275, %v280
      %v285 = vrsqrt.pop %v251
      %v286 = vmul.f32 %v285, %v251
      %v287 = vmul.f32 %v286, %v285
      %v288 = vmul.f32 0.5, %v287
      %v289 = vsub.f32 1.5, %v288
      %v290 = vmul.f32 %v285, %v289
      %vm291 = vweird.f32 %v251
      %vm292 = vweird.f32 %v285
      %vm293 = vmor %vm291, %vm292
      %v294 = vsel %vm293, %v285, %v290
      %v295 = vrsqrt.pop %v252
      %v296 = vmul.f32 %v295, %v252
      %v297 = vmul.f32 %v296, %v295
      %v298 = vmul.f32 0.5, %v297
      %v299 = vsub.f32 1.5, %v298
      %v300 = vmul.f32 %v295, %v299
      %vm301 = vweird.f32 %v252
      %vm302 = vweird.f32 %v295
      %vm303 = vmor %vm301, %vm302
      %v304 = vsel %vm303, %v295, %v300
      %v305 = vrsqrt.pop %v253
      %v306 = vmul.f32 %v305, %v253
      %v307 = vmul.f32 %v306, %v305
      %v308 = vmul.f32 0.5, %v307
      %v309 = vsub.f32 1.5, %v308
      %v310 = vmul.f32 %v305, %v309
      %vm311 = vweird.f32 %v253
      %vm312 = vweird.f32 %v305
      %vm313 = vmor %vm311, %vm312
      %v314 = vsel %vm313, %v305, %v310
      %v315 = vrsqrt.pop %v254
      %v316 = vmul.f32 %v315, %v254
      %v317 = vmul.f32 %v316, %v315
      %v318 = vmul.f32 0.5, %v317
      %v319 = vsub.f32 1.5, %v318
      %v320 = vmul.f32 %v315, %v319
      %vm321 = vweird.f32 %v254
      %vm322 = vweird.f32 %v315
      %vm323 = vmor %vm321, %vm322
      %v324 = vsel %vm323, %v315, %v320
      %v325 = vrsqrt.pop %v255
      %v326 = vmul.f32 %v325, %v255
      %v327 = vmul.f32 %v326, %v325
      %v328 = vmul.f32 0.5, %v327
      %v329 = vsub.f32 1.5, %v328
      %v330 = vmul.f32 %v325, %v329
      %vm331 = vweird.f32 %v255
      %vm332 = vweird.f32 %v325
      %vm333 = vmor %vm331, %vm332
      %v334 = vsel %vm333, %v325, %v330
      %v335 = vrsqrt.pop %v256
      %v336 = vmul.f32 %v335, %v256
      %v337 = vmul.f32 %v336, %v335
      %v338 = vmul.f32 0.5, %v337
      %v339 = vsub.f32 1.5, %v338
      %v340 = vmul.f32 %v335, %v339
      %vm341 = vweird.f32 %v256
      %vm342 = vweird.f32 %v335
      %vm343 = vmor %vm341, %vm342
      %v344 = vsel %vm343, %v335, %v340
      %v345 = vrsqrt.pop %v257
      %v346 = vmul.f32 %v345, %v257
      %v347 = vmul.f32 %v346, %v345
      %v348 = vmul.f32 0.5, %v347
      %v349 = vsub.f32 1.5, %v348
      %v350 = vmul.f32 %v345, %v349
      %vm351 = vweird.f32 %v257
      %vm352 = vweird.f32 %v345
      %vm353 = vmor %vm351, %vm352
      %v354 = vsel %vm353, %v345, %v350
      %v355 = vrsqrt.pop %v258
      %v356 = vmul.f32 %v355, %v258
      %v357 = vmul.f32 %v356, %v355
      %v358 = vmul.f32 0.5, %v357
      %v359 = vsub.f32 1.5, %v358
      %v360 = vmul.f32 %v355, %v359
      %vm361 = vweird.f32 %v258
      %vm362 = vweird.f32 %v355
      %vm363 = vmor %vm361, %vm362
      %v364 = vsel %vm363, %v355, %v360
      %v365 = vrsqrt.pop %v259
      %v366 = vmul.f32 %v365, %v259
      %v367 = vmul.f32 %v366, %v365
      %v368 = vmul.f32 0.5, %v367
      %v369 = vsub.f32 1.5, %v368
      %v370 = vmul.f32 %v365, %v369
      %vm371 = vweird.f32 %v259
      %vm372 = vweird.f32 %v365
      %vm373 = vmor %vm371, %vm372
      %v374 = vsel %vm373, %v365, %v370
      %v375 = vrsqrt.pop %v260
      %v376 = vmul.f32 %v375, %v260
      %v377 = vmul.f32 %v376, %v375
      %v378 = vmul.f32 0.5, %v377
      %v379 = vsub.f32 1.5, %v378
      %v380 = vmul.f32 %v375, %v379
      %vm381 = vweird.f32 %v260
      %vm382 = vweird.f32 %v375
      %vm383 = vmor %vm381, %vm382
      %v384 = vsel %vm383, %v375, %v380
      %v385 = vrsqrt.pop %v261
      %v386 = vmul.f32 %v385, %v261
      %v387 = vmul.f32 %v386, %v385
      %v388 = vmul.f32 0.5, %v387
      %v389 = vsub.f32 1.5, %v388
      %v390 = vmul.f32 %v385, %v389
      %vm391 = vweird.f32 %v261
      %vm392 = vweird.f32 %v385
      %vm393 = vmor %vm391, %vm392
      %v394 = vsel %vm393, %v385, %v390
      %v395 = vrsqrt.pop %v262
      %v396 = vmul.f32 %v395, %v262
      %v397 = vmul.f32 %v396, %v395
      %v398 = vmul.f32 0.5, %v397
      %v399 = vsub.f32 1.5, %v398
      %v400 = vmul.f32 %v395, %v399
      %vm401 = vweird.f32 %v262
      %vm402 = vweird.f32 %v395
      %vm403 = vmor %vm401, %vm402
      %v404 = vsel %vm403, %v395, %v400
      %v405 = vrsqrt.pop %v263
      %v406 = vmul.f32 %v405, %v263
      %v407 = vmul.f32 %v406, %v405
      %v408 = vmul.f32 0.5, %v407
      %v409 = vsub.f32 1.5, %v408
      %v410 = vmul.f32 %v405, %v409
      %vm411 = vweird.f32 %v263
      %vm412 = vweird.f32 %v405
      %vm413 = vmor %vm411, %vm412
      %v414 = vsel %vm413, %v405, %v410
      %v415 = vrsqrt.pop %v264
      %v416 = vmul.f32 %v415, %v264
      %v417 = vmul.f32 %v416, %v415
      %v418 = vmul.f32 0.5, %v417
      %v419 = vsub.f32 1.5, %v418
      %v420 = vmul.f32 %v415, %v419
      %vm421 = vweird.f32 %v264
      %vm422 = vweird.f32 %v415
      %vm423 = vmor %vm421, %vm422
      %v424 = vsel %vm423, %v415, %v420
      %426 = vset.pattern.permute.xlu0 8
      %427 = vperm.xlu0 %426, %v274
      %v428 = vpop.permute.xlu0 %427
      %431 = vset.pattern.permute.xlu0 8
      %432 = vperm.xlu0 %431, %v284
      %v433 = vpop.permute.xlu0 %432
      %436 = vset.pattern.permute.xlu0 8
      %437 = vperm.xlu0 %436, %v294
      %v438 = vpop.permute.xlu0 %437
      %441 = vset.pattern.permute.xlu0 8
      %442 = vperm.xlu0 %441, %v304
      %v443 = vpop.permute.xlu0 %442
      %446 = vset.pattern.permute.xlu0 8
      %447 = vperm.xlu0 %446, %v314
      %v448 = vpop.permute.xlu0 %447
      %451 = vset.pattern.permute.xlu0 8
      %452 = vperm.xlu0 %451, %v324
      %v453 = vpop.permute.xlu0 %452
      %456 = vset.pattern.permute.xlu0 8
      %457 = vperm.xlu0 %456, %v334
      %v458 = vpop.permute.xlu0 %457
      %461 = vset.pattern.permute.xlu0 8
      %462 = vperm.xlu0 %461, %v344
      %v463 = vpop.permute.xlu0 %462
      %466 = vset.pattern.permute.xlu0 8
      %467 = vperm.xlu0 %466, %v354
      %v468 = vpop.permute.xlu0 %467
      %471 = vset.pattern.permute.xlu0 8
      %472 = vperm.xlu0 %471, %v364
      %v473 = vpop.permute.xlu0 %472
      %476 = vset.pattern.permute.xlu0 8
      %477 = vperm.xlu0 %476, %v374
      %v478 = vpop.permute.xlu0 %477
      %481 = vset.pattern.permute.xlu0 8
      %482 = vperm.xlu0 %481, %v384
      %v483 = vpop.permute.xlu0 %482
      %486 = vset.pattern.permute.xlu0 8
      %487 = vperm.xlu0 %486, %v394
      %v488 = vpop.permute.xlu0 %487
      %491 = vset.pattern.permute.xlu0 8
      %492 = vperm.xlu0 %491, %v404
      %v493 = vpop.permute.xlu0 %492
      %496 = vset.pattern.permute.xlu0 8
      %497 = vperm.xlu0 %496, %v414
      %v498 = vpop.permute.xlu0 %497
      %501 = vset.pattern.permute.xlu0 8
      %502 = vperm.xlu0 %501, %v424
      %v503 = vpop.permute.xlu0 %502
      %v505 = vmul.f32 %v233, %v428
      %v506 = vmul.f32 %v234, %v433
      %v507 = vmul.f32 %v235, %v438
      %v508 = vmul.f32 %v236, %v443
      %v509 = vmul.f32 %v237, %v448
      %v510 = vmul.f32 %v238, %v453
      %v511 = vmul.f32 %v239, %v458
      %v512 = vmul.f32 %v240, %v463
      %v513 = vmul.f32 %v241, %v468
      %v514 = vmul.f32 %v242, %v473
      %v515 = vmul.f32 %v243, %v478
      %v516 = vmul.f32 %v244, %v483
      %v517 = vmul.f32 %v245, %v488
      %v518 = vmul.f32 %v246, %v493
      %v519 = vmul.f32 %v247, %v498
      %v520 = vmul.f32 %v248, %v503
      %v521 = vld [vmem:[#allocation8] sm:$0xff]
      %v522 = vld [vmem:[#allocation8 + $0x8] sm:$0xff]
      %v523 = vld [vmem:[#allocation8 + $0x10] sm:$0xff]
      %v524 = vld [vmem:[#allocation8 + $0x18] sm:$0xff]
      %v525 = vld [vmem:[#allocation8 + $0x20] sm:$0xff]
      %v526 = vld [vmem:[#allocation8 + $0x28] sm:$0xff]
      %v527 = vld [vmem:[#allocation8 + $0x30] sm:$0xff]
      %v528 = vld [vmem:[#allocation8 + $0x38] sm:$0xff]
      %v529 = vld [vmem:[#allocation8 + $0x40] sm:$0xff]
      %v530 = vld [vmem:[#allocation8 + $0x48] sm:$0xff]
      %v531 = vld [vmem:[#allocation8 + $0x50] sm:$0xff]
      %v532 = vld [vmem:[#allocation8 + $0x58] sm:$0xff]
      %v533 = vld [vmem:[#allocation8 + $0x60] sm:$0xff]
      %v534 = vld [vmem:[#allocation8 + $0x68] sm:$0xff]
      %v535 = vld [vmem:[#allocation8 + $0x70] sm:$0xff]
      %v536 = vld [vmem:[#allocation8 + $0x78] sm:$0xff]
      %v537 = vld [vmem:[%s3] sm:$0x1]
      %v539 = vperm.slane %v537, 0
      %541 = vmatpush.msra.mxu0 %v536
      %542 = vmatpush.msra.mxu0 %v535
      %543 = vmatpush.msra.mxu0 %v534
      %544 = vmatpush.msra.mxu0 %v533
      %545 = vmatpush.msra.mxu0 %v532
      %546 = vmatpush.msra.mxu0 %v531
      %547 = vmatpush.msra.mxu0 %v530
      %548 = vmatpush.msra.mxu0 %v529
      %549 = vmatpush.msra.mxu0 %v528
      %550 = vmatpush.msra.mxu0 %v527
      %551 = vmatpush.msra.mxu0 %v526
      %552 = vmatpush.msra.mxu0 %v525
      %553 = vmatpush.msra.mxu0 %v524
      %554 = vmatpush.msra.mxu0 %v523
      %555 = vmatpush.msra.mxu0 %v522
      %556 = vmatpush.msra.mxu0 %v521
      %557 = vmatmul.f32.gmra.mxu0 %v505
      %v558 = vpop.f32.mrf.mxu0
      %v559 = vadd.f32 %v539, %v558
      %560 = vmatmul.f32.gmra.mxu0 %v506
      %v561 = vpop.f32.mrf.mxu0
      %v562 = vadd.f32 %v539, %v561
      %563 = vmatmul.f32.gmra.mxu0 %v507
      %v564 = vpop.f32.mrf.mxu0
      %v565 = vadd.f32 %v539, %v564
      %566 = vmatmul.f32.gmra.mxu0 %v508
      %v567 = vpop.f32.mrf.mxu0
      %v568 = vadd.f32 %v539, %v567
      %569 = vmatmul.f32.gmra.mxu0 %v509
      %v570 = vpop.f32.mrf.mxu0
      %v571 = vadd.f32 %v539, %v570
      %572 = vmatmul.f32.gmra.mxu0 %v510
      %v573 = vpop.f32.mrf.mxu0
      %v574 = vadd.f32 %v539, %v573
      %575 = vmatmul.f32.gmra.mxu0 %v511
      %v576 = vpop.f32.mrf.mxu0
      %v577 = vadd.f32 %v539, %v576
      %578 = vmatmul.f32.gmra.mxu0 %v512
      %v579 = vpop.f32.mrf.mxu0
      %v580 = vadd.f32 %v539, %v579
      %581 = vmatmul.f32.gmra.mxu0 %v513
      %v582 = vpop.f32.mrf.mxu0
      %v583 = vadd.f32 %v539, %v582
      %584 = vmatmul.f32.gmra.mxu0 %v514
      %v585 = vpop.f32.mrf.mxu0
      %v586 = vadd.f32 %v539, %v585
      %587 = vmatmul.f32.gmra.mxu0 %v515
      %v588 = vpop.f32.mrf.mxu0
      %v589 = vadd.f32 %v539, %v588
      %590 = vmatmul.f32.gmra.mxu0 %v516
      %v591 = vpop.f32.mrf.mxu0
      %v592 = vadd.f32 %v539, %v591
      %593 = vmatmul.f32.gmra.mxu0 %v517
      %v594 = vpop.f32.mrf.mxu0
      %v595 = vadd.f32 %v539, %v594
      %596 = vmatmul.f32.gmra.mxu0 %v518
      %v597 = vpop.f32.mrf.mxu0
      %v598 = vadd.f32 %v539, %v597
      %599 = vmatmul.f32.gmra.mxu0 %v519
      %v600 = vpop.f32.mrf.mxu0
      %v601 = vadd.f32 %v539, %v600
      %602 = vmatmul.f32.gmra.mxu0 %v520
      %v603 = vpop.f32.mrf.mxu0
      %v604 = vadd.f32 %v539, %v603
      %605 = vdwg.mxu0
      %v606 = vmax.f32 %v559, 0.0
      %v607 = vmax.f32 %v562, 0.0
      %v608 = vmax.f32 %v565, 0.0
      %v609 = vmax.f32 %v568, 0.0
      %v610 = vmax.f32 %v571, 0.0
      %v611 = vmax.f32 %v574, 0.0
      %v612 = vmax.f32 %v577, 0.0
      %v613 = vmax.f32 %v580, 0.0
      %v614 = vmax.f32 %v583, 0.0
      %v615 = vmax.f32 %v586, 0.0
      %v616 = vmax.f32 %v589, 0.0
      %v617 = vmax.f32 %v592, 0.0
      %v618 = vmax.f32 %v595, 0.0
      %v619 = vmax.f32 %v598, 0.0
      %v620 = vmax.f32 %v601, 0.0
      %v621 = vmax.f32 %v604, 0.0
      %622 = vst [vmem:[#allocation9] sm:$0xff] %v606
      %623 = vst [vmem:[#allocation9 + $0x8] sm:$0xff] %v607
      %624 = vst [vmem:[#allocation9 + $0x10] sm:$0xff] %v608
      %625 = vst [vmem:[#allocation9 + $0x18] sm:$0xff] %v609
      %626 = vst [vmem:[#allocation9 + $0x20] sm:$0xff] %v610
      %627 = vst [vmem:[#allocation9 + $0x28] sm:$0xff] %v611
      %628 = vst [vmem:[#allocation9 + $0x30] sm:$0xff] %v612
      %629 = vst [vmem:[#allocation9 + $0x38] sm:$0xff] %v613
      %630 = vst [vmem:[#allocation9 + $0x40] sm:$0xff] %v614
      %631 = vst [vmem:[#allocation9 + $0x48] sm:$0xff] %v615
      %632 = vst [vmem:[#allocation9 + $0x50] sm:$0xff] %v616
      %633 = vst [vmem:[#allocation9 + $0x58] sm:$0xff] %v617
      %634 = vst [vmem:[#allocation9 + $0x60] sm:$0xff] %v618
      %635 = vst [vmem:[#allocation9 + $0x68] sm:$0xff] %v619
      %636 = vst [vmem:[#allocation9 + $0x70] sm:$0xff] %v620
      %637 = vst [vmem:[#allocation9 + $0x78] sm:$0xff] %v621
    $region37: #{tpu_custom_call.1} parent=1 // pred_fallthru
      _
    // Predicated region
    $region38: #{tpu_custom_call.1} parent=1 // pred_check
      _
    $region39: #{tpu_custom_call.1} parent=1 // pred_check_branch
      %639 = sbr.rel (0) target = $region41
    $region40: #{tpu_custom_call.1} parent=1 // pred_region
      %641 = vsyncadd [#allocation5], 0
      %s642 = sshll.u32 [#allocation9], 4
      %s643 = int_to_ptr.vmem [resolvable:$true] %s642
      %s644 = sshll.u32 %s4, 4
      %s645 = int_to_ptr.hbm [resolvable:$true] %s644
      %650 = dma.vmem_to_hbm [thread:$0]  %s643, 2048, %s645, [#allocation5], 128, 128, 8
    $region41: #{tpu_custom_call.1} parent=1 // pred_fallthru
      _
    // Predicated region
    $region42: #{tpu_custom_call.1} parent=1 // pred_check
      _
    $region43: #{tpu_custom_call.1} parent=1 // pred_check_branch
      %652 = sbr.rel (0) target = $region45
    $region44: #{tpu_custom_call.1} parent=1 // pred_region
      %654 = dma.done [#allocation5], 2048
    $region45: #{tpu_custom_call.1} parent=1 // pred_fallthru
      _
    %655 = vsyncpa [#allocation4], 1
    %656 = vsyncpa [#allocation7], 1
    %657 = vsyncpa [#allocation5], 1

</llo_original>
